<compile_context>
chip_gen: v5e
topology: v5e:2x2
jax: 0.10.0
libtpu: 0.0.40
codegen_flags: <defaults>
</compile_context>

<pallas_src>
import functools

import jax
import jax.numpy as jnp
from jax import lax
from jax.experimental import pallas as pl
from jax.experimental.pallas import tpu as pltpu


# Tap order (row-major 3x3 window, padding=1). Center tap needs no edge mask.
_TAPS = [(di, dj) for di in range(3) for dj in range(3)]
_CENTER = 4  # (di, dj) == (1, 1)


def conv_ode_kernel(x_ref, m_ref, w_ref, o_ref, xcols_ref, *, H, W, C, Nb):
    """One grid step = Nb images, NCHW flattened spatially.

    x_ref     : (Nb, C, H*W)  input slab, H*W on the 128-lane axis
    m_ref     : (9, H*W)      precomputed edge masks (grid-constant input)
    w_ref     : (C, 9*C)      fused weights: w[co, k*C + ci] = dw[k, ci] * pw[ci, co]
    o_ref     : (Nb, C, H*W)  output slab (lane-dense stores)
    xcols_ref : (9*C, H*W)    VMEM scratch: im2col columns, streamed per tap
    """
    HW = H * W
    w = w_ref[...]                                     # (C, 9*C); hoisted once per step

    # Fully-unrolled per-image loop (Nb is small & static; the streamed scratch
    # keeps the live set to ~one tap, so unrolling costs no registers).
    for b in range(Nb):
        x = x_ref[b].astype(jnp.float32)               # (C, HW)

        # Build the 9 shifted taps with lane rotations (XLU) and zero the
        # out-of-bounds lanes with the precomputed masks; stream into scratch.
        for k, (di, dj) in enumerate(_TAPS):
            s = (di - 1) * W + (dj - 1)                # flat offset: out[p] <- x[p + s]
            xt = x if s == 0 else pltpu.roll(x, shift=(-s) % HW, axis=1)
            if k != _CENTER:
                xt = xt * m_ref[k]                     # (HW,) broadcast over C sublanes
            xcols_ref[pl.ds(k * C, C), :] = xt

        # Fused depthwise+pointwise conv == single MXU matmul, then relu.
        y = jnp.dot(w, xcols_ref[...], preferred_element_type=jnp.float32)  # (C, HW)
        o_ref[b] = jnp.maximum(y, 0.0).astype(o_ref.dtype)


def _fuse_weights(dw, pw):
    """Fold depthwise (3,3,C_in) and pointwise (C_in,C_out) into (C_out, 9*C_in).

    Valid because MBConv applies no BN/activation between the dw and pw convs
    (bn=False here).  Fusion is done in f32 before any downcast.
    """
    # TODO(synk): assumes thrifty MBConv is a plain depthwise-separable conv
    # (dw 3x3 -> pw 1x1, no intermediate nonlinearity); verify against the repo.
    C_in, C_out = pw.shape
    w9 = dw.astype(jnp.float32).reshape(9, C_in)[:, :, None] * \
         pw.astype(jnp.float32)[None, :, :]                     # (9, C_in, C_out)
    return jnp.transpose(w9.reshape(9 * C_in, C_out))           # (C_out, 9*C_in)


def _edge_masks(H, W, dtype=jnp.float32):
    """(9, H*W) masks zeroing taps that fall outside the padded image. Host-side."""
    HW = H * W
    p = jnp.arange(HW, dtype=jnp.int32)
    h = p // W
    w = p % W
    rows = []
    for di, dj in _TAPS:
        m = jnp.ones((HW,), dtype=jnp.bool_)
        if di == 0:
            m = m & (h >= 1)
        if di == 2:
            m = m & (h < H - 1)
        if dj == 0:
            m = m & (w >= 1)
        if dj == 2:
            m = m & (w < W - 1)
        rows.append(m)
    return jnp.stack(rows).astype(dtype)


def _pick_batch_per_step(N, C, HW, itemsize=4, vmem_budget_bytes=8 << 20):
    """Largest Nb dividing N with >=2 grid steps (v7x megacore) and a small block."""
    best = 1
    for nb in range(1, N + 1):
        if N % nb:
            continue
        if N >= 2 and N // nb < 2:
            continue
        # x block + out block, double-buffered each (+ 9x im2col scratch, once).
        if (4 * nb * C * HW + 9 * C * HW) * itemsize > vmem_budget_bytes:
            continue
        best = nb
    return best


def conv_ode_func_forward(t, x_nchw, dw, pw, *, batch_per_step=None):
    """ConvODEFunc.forward(t, x): t is ignored (only bumps nfe in PyTorch)."""
    del t
    N, C, H, W = x_nchw.shape
    HW = H * W

    x_flat = x_nchw.reshape(N, C, HW)                  # contiguous reshape: free
    w_mat = _fuse_weights(dw, pw)                      # tiny (C, 9*C), f32
    masks = _edge_masks(H, W)                          # (9, HW) grid-constant

    nb = batch_per_step or _pick_batch_per_step(N, C, HW)
    assert N % nb == 0, "batch_per_step must divide N"
    grid = (N // nb,)

    kernel = functools.partial(conv_ode_kernel, H=H, W=W, C=C, Nb=nb)
    cost = pl.CostEstimate(
        flops=2 * N * C * 9 * C * HW,
        transcendentals=0,
        bytes_accessed=(2 * N * C * HW + 9 * HW + 9 * C * C) * 4,
    )

    out_flat = pl.pallas_call(
        kernel,
        out_shape=jax.ShapeDtypeStruct((N, C, HW), x_nchw.dtype),
        grid_spec=pltpu.PrefetchScalarGridSpec(
            num_scalar_prefetch=0,
            grid=grid,
            in_specs=[
                pl.BlockSpec((nb, C, HW), lambda n: (n, 0, 0)),
                pl.BlockSpec((9, HW), lambda n: (0, 0)),       # constant across grid
                pl.BlockSpec((C, 9 * C), lambda n: (0, 0)),    # constant across grid
            ],
            out_specs=pl.BlockSpec((nb, C, HW), lambda n: (n, 0, 0)),
            scratch_shapes=[pltpu.VMEM((9 * C, HW), jnp.float32)],
        ),
        compiler_params=pltpu.CompilerParams(
            dimension_semantics=("parallel",)),
        cost_estimate=cost,
    )(x_flat, masks, w_mat)

    return out_flat.reshape(N, C, H, W)


def reference_forward(x_nchw, dw, pw):
    """Pure-JAX reference (depthwise 3x3 + pointwise 1x1 + relu) in NCHW."""
    N, C, H, W = x_nchw.shape
    dw_oihw = jnp.transpose(dw, (2, 0, 1))[:, None, :, :]          # (C,1,3,3)
    y = lax.conv_general_dilated(
        x_nchw, dw_oihw, window_strides=(1, 1), padding='SAME',
        feature_group_count=C,
        dimension_numbers=('NCHW', 'OIHW', 'NCHW'))
    pw_oihw = jnp.transpose(pw, (1, 0))[:, :, None, None]          # (Cout,Cin,1,1)
    y = lax.conv_general_dilated(
        y, pw_oihw, window_strides=(1, 1), padding='VALID',
        dimension_numbers=('NCHW', 'OIHW', 'NCHW'))
    return jnp.maximum(y, 0.0)


if __name__ == "__main__":
    # Small deterministic setup: batch=4 (-> 2 grid steps of 2 images each),
    # n_filters=8, spatial=16x16 (H*W = 256: lane-dense).
    N, C, H, W = 4, 8, 16, 16
    key = jax.random.PRNGKey(0)
    kx, kd, kp = jax.random.split(key, 3)

    x = jax.random.normal(kx, (N, C, H, W), dtype=jnp.float32)
    # Deterministic synthetic parameters (MBConv has no bias terms).
    dw = 0.1 * jax.random.normal(kd, (3, 3, C), dtype=jnp.float32)   # depthwise 3x3
    pw = 0.1 * jax.random.normal(kp, (C, C), dtype=jnp.float32)      # pointwise (Cin, Cout)
    t = jnp.float32(0.0)  # unused, kept for signature fidelity

    out = jax.block_until_ready(conv_ode_func_forward(t, x, dw, pw))
    ref = jax.block_until_ready(reference_forward(x, dw, pw))

    assert out.shape == (N, C, H, W)
    assert jnp.allclose(out, ref, atol=1e-4, rtol=1e-4)
    print("KERNEL_OK")
</pallas_src>

<mosaic_0001>
module attributes {stable_mosaic.version = 11 : i64} {
  func.func @conv_ode_kernel(%arg0: i32, %arg1: memref<2x8x256xf32, #tpu.memory_space<vmem>>, %arg2: memref<9x256xf32, #tpu.memory_space<vmem>>, %arg3: memref<8x72xf32, #tpu.memory_space<vmem>>, %arg4: memref<2x8x256xf32, #tpu.memory_space<vmem>>, %arg5: memref<72x256xf32, #tpu.memory_space<vmem>>) attributes {dimension_semantics = [#tpu.dimension_semantics<parallel>], iteration_bounds = array<i64: 2>, scalar_prefetch = 0 : i64, scratch_operands = 1 : i64, tpu.core_type = #tpu.core_type<tc>, window_params = [{transform_indices = @transform_0, window_bounds = array<i64: 2, 8, 256>}, {pipeline_mode = #tpu.pipeline_mode<synchronous>, transform_indices = @transform_1, window_bounds = array<i64: 9, 256>}, {pipeline_mode = #tpu.pipeline_mode<synchronous>, transform_indices = @transform_2, window_bounds = array<i64: 8, 72>}, {transform_indices = @transform_3, window_bounds = array<i64: 2, 8, 256>}]} {
    %c0 = arith.constant 0 : index
    %c0_0 = arith.constant 0 : index
    %0 = vector.load %arg3[%c0, %c0_0] : memref<8x72xf32, #tpu.memory_space<vmem>>, vector<8x72xf32>
    %c0_1 = arith.constant 0 : index
    %c0_2 = arith.constant 0 : index
    %c0_3 = arith.constant 0 : index
    %1 = vector.load %arg1[%c0_1, %c0_2, %c0_3] : memref<2x8x256xf32, #tpu.memory_space<vmem>>, vector<1x8x256xf32>
    %2 = vector.shape_cast %1 : vector<1x8x256xf32> to vector<8x256xf32>
    %c17_i32 = arith.constant 17 : i32
    %3 = tpu.dynamic_rotate %2 by %c17_i32 dim 1 : vector<8x256xf32>, i32 -> vector<8x256xf32>
    %c0_4 = arith.constant 0 : index
    %c0_5 = arith.constant 0 : index
    %4 = vector.load %arg2[%c0_4, %c0_5] : memref<9x256xf32, #tpu.memory_space<vmem>>, vector<1x256xf32>
    %5 = vector.shape_cast %4 : vector<1x256xf32> to vector<256xf32>
    %6 = vector.shape_cast %5 : vector<256xf32> to vector<1x256xf32>
    %7 = vector.broadcast %6 : vector<1x256xf32> to vector<8x256xf32>
    %8 = arith.mulf %3, %7 : vector<8x256xf32>
    %c0_6 = arith.constant 0 : index
    %c0_7 = arith.constant 0 : index
    %9 = vector.load %arg5[%c0_6, %c0_7] : memref<72x256xf32, #tpu.memory_space<vmem>>, vector<8x256xf32>
    tpu.vector_store %arg5[%c0_6, %c0_7], %8 {strides = array<i32>} : memref<72x256xf32, #tpu.memory_space<vmem>>, vector<8x256xf32>,
    %c16_i32 = arith.constant 16 : i32
    %10 = tpu.dynamic_rotate %2 by %c16_i32 dim 1 : vector<8x256xf32>, i32 -> vector<8x256xf32>
    %c1 = arith.constant 1 : index
    %c0_8 = arith.constant 0 : index
    %11 = vector.load %arg2[%c1, %c0_8] : memref<9x256xf32, #tpu.memory_space<vmem>>, vector<1x256xf32>
    %12 = vector.shape_cast %11 : vector<1x256xf32> to vector<256xf32>
    %13 = vector.shape_cast %12 : vector<256xf32> to vector<1x256xf32>
    %14 = vector.broadcast %13 : vector<1x256xf32> to vector<8x256xf32>
    %15 = arith.mulf %10, %14 : vector<8x256xf32>
    %c8 = arith.constant 8 : index
    %c0_9 = arith.constant 0 : index
    %16 = vector.load %arg5[%c8, %c0_9] : memref<72x256xf32, #tpu.memory_space<vmem>>, vector<8x256xf32>
    tpu.vector_store %arg5[%c8, %c0_9], %15 {strides = array<i32>} : memref<72x256xf32, #tpu.memory_space<vmem>>, vector<8x256xf32>,
    %c15_i32 = arith.constant 15 : i32
    %17 = tpu.dynamic_rotate %2 by %c15_i32 dim 1 : vector<8x256xf32>, i32 -> vector<8x256xf32>
    %c2 = arith.constant 2 : index
    %c0_10 = arith.constant 0 : index
    %18 = vector.load %arg2[%c2, %c0_10] : memref<9x256xf32, #tpu.memory_space<vmem>>, vector<1x256xf32>
    %19 = vector.shape_cast %18 : vector<1x256xf32> to vector<256xf32>
    %20 = vector.shape_cast %19 : vector<256xf32> to vector<1x256xf32>
    %21 = vector.broadcast %20 : vector<1x256xf32> to vector<8x256xf32>
    %22 = arith.mulf %17, %21 : vector<8x256xf32>
    %c16 = arith.constant 16 : index
    %c0_11 = arith.constant 0 : index
    %23 = vector.load %arg5[%c16, %c0_11] : memref<72x256xf32, #tpu.memory_space<vmem>>, vector<8x256xf32>
    tpu.vector_store %arg5[%c16, %c0_11], %22 {strides = array<i32>} : memref<72x256xf32, #tpu.memory_space<vmem>>, vector<8x256xf32>,
    %c1_i32 = arith.constant 1 : i32
    %24 = tpu.dynamic_rotate %2 by %c1_i32 dim 1 : vector<8x256xf32>, i32 -> vector<8x256xf32>
    %c3 = arith.constant 3 : index
    %c0_12 = arith.constant 0 : index
    %25 = vector.load %arg2[%c3, %c0_12] : memref<9x256xf32, #tpu.memory_space<vmem>>, vector<1x256xf32>
    %26 = vector.shape_cast %25 : vector<1x256xf32> to vector<256xf32>
    %27 = vector.shape_cast %26 : vector<256xf32> to vector<1x256xf32>
    %28 = vector.broadcast %27 : vector<1x256xf32> to vector<8x256xf32>
    %29 = arith.mulf %24, %28 : vector<8x256xf32>
    %c24 = arith.constant 24 : index
    %c0_13 = arith.constant 0 : index
    %30 = vector.load %arg5[%c24, %c0_13] : memref<72x256xf32, #tpu.memory_space<vmem>>, vector<8x256xf32>
    tpu.vector_store %arg5[%c24, %c0_13], %29 {strides = array<i32>} : memref<72x256xf32, #tpu.memory_space<vmem>>, vector<8x256xf32>,
    %c32 = arith.constant 32 : index
    %c0_14 = arith.constant 0 : index
    %31 = vector.load %arg5[%c32, %c0_14] : memref<72x256xf32, #tpu.memory_space<vmem>>, vector<8x256xf32>
    tpu.vector_store %arg5[%c32, %c0_14], %2 {strides = array<i32>} : memref<72x256xf32, #tpu.memory_space<vmem>>, vector<8x256xf32>,
    %c255_i32 = arith.constant 255 : i32
    %32 = tpu.dynamic_rotate %2 by %c255_i32 dim 1 : vector<8x256xf32>, i32 -> vector<8x256xf32>
    %c5 = arith.constant 5 : index
    %c0_15 = arith.constant 0 : index
    %33 = vector.load %arg2[%c5, %c0_15] : memref<9x256xf32, #tpu.memory_space<vmem>>, vector<1x256xf32>
    %34 = vector.shape_cast %33 : vector<1x256xf32> to vector<256xf32>
    %35 = vector.shape_cast %34 : vector<256xf32> to vector<1x256xf32>
    %36 = vector.broadcast %35 : vector<1x256xf32> to vector<8x256xf32>
    %37 = arith.mulf %32, %36 : vector<8x256xf32>
    %c40 = arith.constant 40 : index
    %c0_16 = arith.constant 0 : index
    %38 = vector.load %arg5[%c40, %c0_16] : memref<72x256xf32, #tpu.memory_space<vmem>>, vector<8x256xf32>
    tpu.vector_store %arg5[%c40, %c0_16], %37 {strides = array<i32>} : memref<72x256xf32, #tpu.memory_space<vmem>>, vector<8x256xf32>,
    %c241_i32 = arith.constant 241 : i32
    %39 = tpu.dynamic_rotate %2 by %c241_i32 dim 1 : vector<8x256xf32>, i32 -> vector<8x256xf32>
    %c6 = arith.constant 6 : index
    %c0_17 = arith.constant 0 : index
    %40 = vector.load %arg2[%c6, %c0_17] : memref<9x256xf32, #tpu.memory_space<vmem>>, vector<1x256xf32>
    %41 = vector.shape_cast %40 : vector<1x256xf32> to vector<256xf32>
    %42 = vector.shape_cast %41 : vector<256xf32> to vector<1x256xf32>
    %43 = vector.broadcast %42 : vector<1x256xf32> to vector<8x256xf32>
    %44 = arith.mulf %39, %43 : vector<8x256xf32>
    %c48 = arith.constant 48 : index
    %c0_18 = arith.constant 0 : index
    %45 = vector.load %arg5[%c48, %c0_18] : memref<72x256xf32, #tpu.memory_space<vmem>>, vector<8x256xf32>
    tpu.vector_store %arg5[%c48, %c0_18], %44 {strides = array<i32>} : memref<72x256xf32, #tpu.memory_space<vmem>>, vector<8x256xf32>,
    %c240_i32 = arith.constant 240 : i32
    %46 = tpu.dynamic_rotate %2 by %c240_i32 dim 1 : vector<8x256xf32>, i32 -> vector<8x256xf32>
    %c7 = arith.constant 7 : index
    %c0_19 = arith.constant 0 : index
    %47 = vector.load %arg2[%c7, %c0_19] : memref<9x256xf32, #tpu.memory_space<vmem>>, vector<1x256xf32>
    %48 = vector.shape_cast %47 : vector<1x256xf32> to vector<256xf32>
    %49 = vector.shape_cast %48 : vector<256xf32> to vector<1x256xf32>
    %50 = vector.broadcast %49 : vector<1x256xf32> to vector<8x256xf32>
    %51 = arith.mulf %46, %50 : vector<8x256xf32>
    %c56 = arith.constant 56 : index
    %c0_20 = arith.constant 0 : index
    %52 = vector.load %arg5[%c56, %c0_20] : memref<72x256xf32, #tpu.memory_space<vmem>>, vector<8x256xf32>
    tpu.vector_store %arg5[%c56, %c0_20], %51 {strides = array<i32>} : memref<72x256xf32, #tpu.memory_space<vmem>>, vector<8x256xf32>,
    %c239_i32 = arith.constant 239 : i32
    %53 = tpu.dynamic_rotate %2 by %c239_i32 dim 1 : vector<8x256xf32>, i32 -> vector<8x256xf32>
    %c8_21 = arith.constant 8 : index
    %c0_22 = arith.constant 0 : index
    %54 = vector.load %arg2[%c8_21, %c0_22] : memref<9x256xf32, #tpu.memory_space<vmem>>, vector<1x256xf32>
    %55 = vector.shape_cast %54 : vector<1x256xf32> to vector<256xf32>
    %56 = vector.shape_cast %55 : vector<256xf32> to vector<1x256xf32>
    %57 = vector.broadcast %56 : vector<1x256xf32> to vector<8x256xf32>
    %58 = arith.mulf %53, %57 : vector<8x256xf32>
    %c64 = arith.constant 64 : index
    %c0_23 = arith.constant 0 : index
    %59 = vector.load %arg5[%c64, %c0_23] : memref<72x256xf32, #tpu.memory_space<vmem>>, vector<8x256xf32>
    tpu.vector_store %arg5[%c64, %c0_23], %58 {strides = array<i32>} : memref<72x256xf32, #tpu.memory_space<vmem>>, vector<8x256xf32>,
    %c0_24 = arith.constant 0 : index
    %c0_25 = arith.constant 0 : index
    %60 = vector.load %arg5[%c0_24, %c0_25] : memref<72x256xf32, #tpu.memory_space<vmem>>, vector<72x256xf32>
    %cst = arith.constant dense<0.000000e+00> : vector<8x256xf32>
    %61 = tpu.matmul %0, %60, %cst {dimension_numbers = #tpu.dot_dimension_numbers<[1], [0], [0], [1], [0, 0, 1, 1], [], []>} : vector<8x72xf32>, vector<72x256xf32>, vector<8x256xf32> -> vector<8x256xf32>
    %cst_26 = arith.constant 0.000000e+00 : f32
    %62 = vector.broadcast %cst_26 : f32 to vector<8x256xf32>
    %63 = arith.maximumf %61, %62 : vector<8x256xf32>
    %c0_27 = arith.constant 0 : index
    %c0_28 = arith.constant 0 : index
    %c0_29 = arith.constant 0 : index
    %64 = vector.load %arg4[%c0_27, %c0_28, %c0_29] : memref<2x8x256xf32, #tpu.memory_space<vmem>>, vector<1x8x256xf32>
    %65 = vector.shape_cast %64 : vector<1x8x256xf32> to vector<8x256xf32>
    %66 = vector.shape_cast %63 : vector<8x256xf32> to vector<1x8x256xf32>
    tpu.vector_store %arg4[%c0_27, %c0_28, %c0_29], %66 {strides = array<i32>} : memref<2x8x256xf32, #tpu.memory_space<vmem>>, vector<1x8x256xf32>,
    %c1_30 = arith.constant 1 : index
    %c0_31 = arith.constant 0 : index
    %c0_32 = arith.constant 0 : index
    %67 = vector.load %arg1[%c1_30, %c0_31, %c0_32] : memref<2x8x256xf32, #tpu.memory_space<vmem>>, vector<1x8x256xf32>
    %68 = vector.shape_cast %67 : vector<1x8x256xf32> to vector<8x256xf32>
    %c17_i32_33 = arith.constant 17 : i32
    %69 = tpu.dynamic_rotate %68 by %c17_i32_33 dim 1 : vector<8x256xf32>, i32 -> vector<8x256xf32>
    %c0_34 = arith.constant 0 : index
    %c0_35 = arith.constant 0 : index
    %70 = vector.load %arg2[%c0_34, %c0_35] : memref<9x256xf32, #tpu.memory_space<vmem>>, vector<1x256xf32>
    %71 = vector.shape_cast %70 : vector<1x256xf32> to vector<256xf32>
    %72 = vector.shape_cast %71 : vector<256xf32> to vector<1x256xf32>
    %73 = vector.broadcast %72 : vector<1x256xf32> to vector<8x256xf32>
    %74 = arith.mulf %69, %73 : vector<8x256xf32>
    %c0_36 = arith.constant 0 : index
    %c0_37 = arith.constant 0 : index
    %75 = vector.load %arg5[%c0_36, %c0_37] : memref<72x256xf32, #tpu.memory_space<vmem>>, vector<8x256xf32>
    tpu.vector_store %arg5[%c0_36, %c0_37], %74 {strides = array<i32>} : memref<72x256xf32, #tpu.memory_space<vmem>>, vector<8x256xf32>,
    %c16_i32_38 = arith.constant 16 : i32
    %76 = tpu.dynamic_rotate %68 by %c16_i32_38 dim 1 : vector<8x256xf32>, i32 -> vector<8x256xf32>
    %c1_39 = arith.constant 1 : index
    %c0_40 = arith.constant 0 : index
    %77 = vector.load %arg2[%c1_39, %c0_40] : memref<9x256xf32, #tpu.memory_space<vmem>>, vector<1x256xf32>
    %78 = vector.shape_cast %77 : vector<1x256xf32> to vector<256xf32>
    %79 = vector.shape_cast %78 : vector<256xf32> to vector<1x256xf32>
    %80 = vector.broadcast %79 : vector<1x256xf32> to vector<8x256xf32>
    %81 = arith.mulf %76, %80 : vector<8x256xf32>
    %c8_41 = arith.constant 8 : index
    %c0_42 = arith.constant 0 : index
    %82 = vector.load %arg5[%c8_41, %c0_42] : memref<72x256xf32, #tpu.memory_space<vmem>>, vector<8x256xf32>
    tpu.vector_store %arg5[%c8_41, %c0_42], %81 {strides = array<i32>} : memref<72x256xf32, #tpu.memory_space<vmem>>, vector<8x256xf32>,
    %c15_i32_43 = arith.constant 15 : i32
    %83 = tpu.dynamic_rotate %68 by %c15_i32_43 dim 1 : vector<8x256xf32>, i32 -> vector<8x256xf32>
    %c2_44 = arith.constant 2 : index
    %c0_45 = arith.constant 0 : index
    %84 = vector.load %arg2[%c2_44, %c0_45] : memref<9x256xf32, #tpu.memory_space<vmem>>, vector<1x256xf32>
    %85 = vector.shape_cast %84 : vector<1x256xf32> to vector<256xf32>
    %86 = vector.shape_cast %85 : vector<256xf32> to vector<1x256xf32>
    %87 = vector.broadcast %86 : vector<1x256xf32> to vector<8x256xf32>
    %88 = arith.mulf %83, %87 : vector<8x256xf32>
    %c16_46 = arith.constant 16 : index
    %c0_47 = arith.constant 0 : index
    %89 = vector.load %arg5[%c16_46, %c0_47] : memref<72x256xf32, #tpu.memory_space<vmem>>, vector<8x256xf32>
    tpu.vector_store %arg5[%c16_46, %c0_47], %88 {strides = array<i32>} : memref<72x256xf32, #tpu.memory_space<vmem>>, vector<8x256xf32>,
    %c1_i32_48 = arith.constant 1 : i32
    %90 = tpu.dynamic_rotate %68 by %c1_i32_48 dim 1 : vector<8x256xf32>, i32 -> vector<8x256xf32>
    %c3_49 = arith.constant 3 : index
    %c0_50 = arith.constant 0 : index
    %91 = vector.load %arg2[%c3_49, %c0_50] : memref<9x256xf32, #tpu.memory_space<vmem>>, vector<1x256xf32>
    %92 = vector.shape_cast %91 : vector<1x256xf32> to vector<256xf32>
    %93 = vector.shape_cast %92 : vector<256xf32> to vector<1x256xf32>
    %94 = vector.broadcast %93 : vector<1x256xf32> to vector<8x256xf32>
    %95 = arith.mulf %90, %94 : vector<8x256xf32>
    %c24_51 = arith.constant 24 : index
    %c0_52 = arith.constant 0 : index
    %96 = vector.load %arg5[%c24_51, %c0_52] : memref<72x256xf32, #tpu.memory_space<vmem>>, vector<8x256xf32>
    tpu.vector_store %arg5[%c24_51, %c0_52], %95 {strides = array<i32>} : memref<72x256xf32, #tpu.memory_space<vmem>>, vector<8x256xf32>,
    %c32_53 = arith.constant 32 : index
    %c0_54 = arith.constant 0 : index
    %97 = vector.load %arg5[%c32_53, %c0_54] : memref<72x256xf32, #tpu.memory_space<vmem>>, vector<8x256xf32>
    tpu.vector_store %arg5[%c32_53, %c0_54], %68 {strides = array<i32>} : memref<72x256xf32, #tpu.memory_space<vmem>>, vector<8x256xf32>,
    %c255_i32_55 = arith.constant 255 : i32
    %98 = tpu.dynamic_rotate %68 by %c255_i32_55 dim 1 : vector<8x256xf32>, i32 -> vector<8x256xf32>
    %c5_56 = arith.constant 5 : index
    %c0_57 = arith.constant 0 : index
    %99 = vector.load %arg2[%c5_56, %c0_57] : memref<9x256xf32, #tpu.memory_space<vmem>>, vector<1x256xf32>
    %100 = vector.shape_cast %99 : vector<1x256xf32> to vector<256xf32>
    %101 = vector.shape_cast %100 : vector<256xf32> to vector<1x256xf32>
    %102 = vector.broadcast %101 : vector<1x256xf32> to vector<8x256xf32>
    %103 = arith.mulf %98, %102 : vector<8x256xf32>
    %c40_58 = arith.constant 40 : index
    %c0_59 = arith.constant 0 : index
    %104 = vector.load %arg5[%c40_58, %c0_59] : memref<72x256xf32, #tpu.memory_space<vmem>>, vector<8x256xf32>
    tpu.vector_store %arg5[%c40_58, %c0_59], %103 {strides = array<i32>} : memref<72x256xf32, #tpu.memory_space<vmem>>, vector<8x256xf32>,
    %c241_i32_60 = arith.constant 241 : i32
    %105 = tpu.dynamic_rotate %68 by %c241_i32_60 dim 1 : vector<8x256xf32>, i32 -> vector<8x256xf32>
    %c6_61 = arith.constant 6 : index
    %c0_62 = arith.constant 0 : index
    %106 = vector.load %arg2[%c6_61, %c0_62] : memref<9x256xf32, #tpu.memory_space<vmem>>, vector<1x256xf32>
    %107 = vector.shape_cast %106 : vector<1x256xf32> to vector<256xf32>
    %108 = vector.shape_cast %107 : vector<256xf32> to vector<1x256xf32>
    %109 = vector.broadcast %108 : vector<1x256xf32> to vector<8x256xf32>
    %110 = arith.mulf %105, %109 : vector<8x256xf32>
    %c48_63 = arith.constant 48 : index
    %c0_64 = arith.constant 0 : index
    %111 = vector.load %arg5[%c48_63, %c0_64] : memref<72x256xf32, #tpu.memory_space<vmem>>, vector<8x256xf32>
    tpu.vector_store %arg5[%c48_63, %c0_64], %110 {strides = array<i32>} : memref<72x256xf32, #tpu.memory_space<vmem>>, vector<8x256xf32>,
    %c240_i32_65 = arith.constant 240 : i32
    %112 = tpu.dynamic_rotate %68 by %c240_i32_65 dim 1 : vector<8x256xf32>, i32 -> vector<8x256xf32>
    %c7_66 = arith.constant 7 : index
    %c0_67 = arith.constant 0 : index
    %113 = vector.load %arg2[%c7_66, %c0_67] : memref<9x256xf32, #tpu.memory_space<vmem>>, vector<1x256xf32>
    %114 = vector.shape_cast %113 : vector<1x256xf32> to vector<256xf32>
    %115 = vector.shape_cast %114 : vector<256xf32> to vector<1x256xf32>
    %116 = vector.broadcast %115 : vector<1x256xf32> to vector<8x256xf32>
    %117 = arith.mulf %112, %116 : vector<8x256xf32>
    %c56_68 = arith.constant 56 : index
    %c0_69 = arith.constant 0 : index
    %118 = vector.load %arg5[%c56_68, %c0_69] : memref<72x256xf32, #tpu.memory_space<vmem>>, vector<8x256xf32>
    tpu.vector_store %arg5[%c56_68, %c0_69], %117 {strides = array<i32>} : memref<72x256xf32, #tpu.memory_space<vmem>>, vector<8x256xf32>,
    %c239_i32_70 = arith.constant 239 : i32
    %119 = tpu.dynamic_rotate %68 by %c239_i32_70 dim 1 : vector<8x256xf32>, i32 -> vector<8x256xf32>
    %c8_71 = arith.constant 8 : index
    %c0_72 = arith.constant 0 : index
    %120 = vector.load %arg2[%c8_71, %c0_72] : memref<9x256xf32, #tpu.memory_space<vmem>>, vector<1x256xf32>
    %121 = vector.shape_cast %120 : vector<1x256xf32> to vector<256xf32>
    %122 = vector.shape_cast %121 : vector<256xf32> to vector<1x256xf32>
    %123 = vector.broadcast %122 : vector<1x256xf32> to vector<8x256xf32>
    %124 = arith.mulf %119, %123 : vector<8x256xf32>
    %c64_73 = arith.constant 64 : index
    %c0_74 = arith.constant 0 : index
    %125 = vector.load %arg5[%c64_73, %c0_74] : memref<72x256xf32, #tpu.memory_space<vmem>>, vector<8x256xf32>
    tpu.vector_store %arg5[%c64_73, %c0_74], %124 {strides = array<i32>} : memref<72x256xf32, #tpu.memory_space<vmem>>, vector<8x256xf32>,
    %c0_75 = arith.constant 0 : index
    %c0_76 = arith.constant 0 : index
    %126 = vector.load %arg5[%c0_75, %c0_76] : memref<72x256xf32, #tpu.memory_space<vmem>>, vector<72x256xf32>
    %cst_77 = arith.constant dense<0.000000e+00> : vector<8x256xf32>
    %127 = tpu.matmul %0, %126, %cst_77 {dimension_numbers = #tpu.dot_dimension_numbers<[1], [0], [0], [1], [0, 0, 1, 1], [], []>} : vector<8x72xf32>, vector<72x256xf32>, vector<8x256xf32> -> vector<8x256xf32>
    %cst_78 = arith.constant 0.000000e+00 : f32
    %128 = vector.broadcast %cst_78 : f32 to vector<8x256xf32>
    %129 = arith.maximumf %127, %128 : vector<8x256xf32>
    %c1_79 = arith.constant 1 : index
    %c0_80 = arith.constant 0 : index
    %c0_81 = arith.constant 0 : index
    %130 = vector.load %arg4[%c1_79, %c0_80, %c0_81] : memref<2x8x256xf32, #tpu.memory_space<vmem>>, vector<1x8x256xf32>
    %131 = vector.shape_cast %130 : vector<1x8x256xf32> to vector<8x256xf32>
    %132 = vector.shape_cast %129 : vector<8x256xf32> to vector<1x8x256xf32>
    tpu.vector_store %arg4[%c1_79, %c0_80, %c0_81], %132 {strides = array<i32>} : memref<2x8x256xf32, #tpu.memory_space<vmem>>, vector<1x8x256xf32>,
    return
  }
  func.func @transform_0(%arg0: i32) -> (i32, i32, i32) {
    %c0_i32 = arith.constant 0 : i32
    %c0_i32_0 = arith.constant 0 : i32
    %c0_i32_1 = arith.constant 0 : i32
    return %arg0, %c0_i32, %c0_i32_0 : i32, i32, i32
  }
  func.func @transform_1(%arg0: i32) -> (i32, i32) {
    %c0_i32 = arith.constant 0 : i32
    %c0_i32_0 = arith.constant 0 : i32
    %c0_i32_1 = arith.constant 0 : i32
    return %c0_i32, %c0_i32_0 : i32, i32
  }
  func.func @transform_2(%arg0: i32) -> (i32, i32) {
    %c0_i32 = arith.constant 0 : i32
    %c0_i32_0 = arith.constant 0 : i32
    %c0_i32_1 = arith.constant 0 : i32
    return %c0_i32, %c0_i32_0 : i32, i32
  }
  func.func @transform_3(%arg0: i32) -> (i32, i32, i32) {
    %c0_i32 = arith.constant 0 : i32
    %c0_i32_0 = arith.constant 0 : i32
    %c0_i32_1 = arith.constant 0 : i32
    return %arg0, %c0_i32, %c0_i32_0 : i32, i32, i32
  }
}

</mosaic_0001>

<llo_original>
// kernel: tpu_custom_call.1
$region0: #{tpu_custom_call.1}
  #allocation0 [shape = 'u32[]', space=smem, size = 0x4, offset = 0x4, fixed_abs, tag = 'smem constant byte address 0x4 - core index']
  #allocation1 [shape = 'u32[72,128]{1,0:T(1,128)}', space=vmem, size = 0x9000, scoped, tag = 'internal scratch']
  #allocation2 [shape = 'f32[72,256]{1,0:T(8,128)}', space=vmem, size = 0x12000, scoped, tag = 'scratch operand']
  %s0 = inlined_call_operand.hbm [shape: f32[4,8,256], index: 0, kind: input, shape index: {}]
  %s1 = inlined_call_operand.hbm [shape: f32[9,256], index: 1, kind: input, shape index: {}]
  %s2 = inlined_call_operand.hbm [shape: f32[8,72], index: 2, kind: input, shape index: {}]
  %s3 = inlined_call_operand.hbm [shape: f32[4,8,256], index: 3, kind: output, shape index: {}]
  %s4 = sld [smem:[#allocation0]]
  $region57: #{tpu_custom_call.1} parent=0
    _
  %s6 = ssub.s32 1, %s4
  %s7 = scalar_select 0, %s6, %s4
  $region1: #{tpu_custom_call.1} parent=0
    #allocation3 [shape = 'u8[32768]{0}', space=vmem, size = 0x8000, scoped, tag = 'input window, operand 0']
    #allocation4 [shape = 's32[2]{0}', space=sflag, size = 0x8, scoped, tag = 'scoped memory for tpu_custom_call.1']
    #allocation5 [shape = 's32[2]{0}', space=sflag, size = 0x8, scoped, tag = 'scoped memory for tpu_custom_call.1']
    #allocation6 [shape = 'u8[16384]{0}', space=vmem, size = 0x4000, scoped, tag = 'input window, operand 1, single buffered']
    #allocation7 [shape = 's32[1]{0}', space=sflag, size = 0x4, scoped, tag = 'scoped memory for tpu_custom_call.1']
    #allocation8 [shape = 'u8[4096]{0}', space=vmem, size = 0x1000, scoped, tag = 'input window, operand 2, single buffered']
    #allocation9 [shape = 'u8[32768]{0}', space=vmem, size = 0x8000, scoped, tag = 'output window, operand 0']
    %8 = vsyncpa [#allocation4], 0
    %s9 = scalar_lea.sflag [#allocation4], 1
    %10 = vsyncpa %s9, 0
    %11 = vsyncpa [#allocation7], 0
    %12 = vsyncpa [#allocation5], 0
    %s13 = scalar_lea.sflag [#allocation5], 1
    %14 = vsyncpa %s13, 0
    loop: start=0, step=1, limit=4
    $region2: #{tpu_custom_call.1} parent=1 // loop_pre_header
      _
    $region3: #{tpu_custom_call.1} parent=1 // loop_header
      %s16 = sphi 0, %s20
      %p17 = scmp.ge.s32.totalorder %s16, 4
      %s26 = sphi 0, %s28
      %s29 = sphi 0, %s26
      %s30 = sphi 0, %s29
      %s46 = sphi 0, %s30
      %s50 = sphi 0, %s50
      %s52 = sphi 0, %s50
      %s53 = sphi 0, %s52
      %s67 = sphi 0, %s53
      %s71 = sphi 0, %s71
      %s73 = sphi 0, %s71
      %s74 = sphi 0, %s73
      %s88 = sphi 0, %s74
      %s94 = sphi 0, %s96
      %s97 = sphi 0, %s94
      %s98 = sphi 0, %s97
      %s114 = sphi 0, %s98
    $region4: #{tpu_custom_call.1} parent=1 // loop_header_branch
      %19 = sbr.rel (%p17) target = $region8
    $region5: #{tpu_custom_call.1} parent=1 // loop_body
      %s21 = ssub.s32 %s16, 1
      %s22 = ssub.s32 %s16, 2
      %s23 = sadd.s32 %s16, 1
      %s24 = ssub.s32 %s16, %s23
      %p25 = scmp.eq.s32.totalorder %s24, 0
      %s27 = sadd.s32 %s26, 1
      %s28 = scalar_select %p25, %s26, %s27
      %p31 = pneg %p25
      %p32 = scmp.eq.s32.totalorder %s16, 1
      %p33 = por %p31, %p32
      %p34 = scmp.ne.s32.totalorder %s26, %s29
      %p35 = scmp.eq.s32.totalorder %s16, 0
      %p36 = por %p34, %p35
      %p37 = scmp.ne.s32.totalorder %s26, %s29
      %p38 = scmp.eq.s32.totalorder %s21, 1
      %p39 = por %p37, %p38
      %p40 = scmp.ne.s32.totalorder %s29, %s30
      %p41 = scmp.eq.s32.totalorder %s21, 0
      %p42 = por %p40, %p41
      %p43 = scmp.ne.s32.totalorder %s29, %s30
      %p44 = scmp.eq.s32.totalorder %s22, 1
      %p45 = por %p43, %p44
      %p47 = scmp.ne.s32.totalorder %s30, %s46
      %p48 = scmp.eq.s32.totalorder %s22, 0
      %p49 = por %p47, %p48
      %s51 = sadd.s32 %s50, 1
      %p54 = scmp.eq.s32.totalorder %s16, 1
      %p55 = scmp.ne.s32.totalorder %s50, %s52
      %p56 = scmp.eq.s32.totalorder %s16, 0
      %p57 = por %p55, %p56
      %p58 = scmp.ne.s32.totalorder %s50, %s52
      %p59 = scmp.eq.s32.totalorder %s21, 1
      %p60 = por %p58, %p59
      %p61 = scmp.ne.s32.totalorder %s52, %s53
      %p62 = scmp.eq.s32.totalorder %s21, 0
      %p63 = por %p61, %p62
      %p64 = scmp.ne.s32.totalorder %s52, %s53
      %p65 = scmp.eq.s32.totalorder %s22, 1
      %p66 = por %p64, %p65
      %p68 = scmp.ne.s32.totalorder %s53, %s67
      %p69 = scmp.eq.s32.totalorder %s22, 0
      %p70 = por %p68, %p69
      %s72 = sadd.s32 %s71, 1
      %p75 = scmp.eq.s32.totalorder %s16, 1
      %p76 = scmp.ne.s32.totalorder %s71, %s73
      %p77 = scmp.eq.s32.totalorder %s16, 0
      %p78 = por %p76, %p77
      %p79 = scmp.ne.s32.totalorder %s71, %s73
      %p80 = scmp.eq.s32.totalorder %s21, 1
      %p81 = por %p79, %p80
      %p82 = scmp.ne.s32.totalorder %s73, %s74
      %p83 = scmp.eq.s32.totalorder %s21, 0
      %p84 = por %p82, %p83
      %p85 = scmp.ne.s32.totalorder %s73, %s74
      %p86 = scmp.eq.s32.totalorder %s22, 1
      %p87 = por %p85, %p86
      %p89 = scmp.ne.s32.totalorder %s74, %s88
      %p90 = scmp.eq.s32.totalorder %s22, 0
      %p91 = por %p89, %p90
      %s92 = ssub.s32 %s16, %s23
      %p93 = scmp.eq.s32.totalorder %s92, 0
      %s95 = sadd.s32 %s94, 1
      %s96 = scalar_select %p93, %s94, %s95
      %p99 = pneg %p93
      %p100 = scmp.eq.s32.totalorder %s16, 1
      %p101 = por %p99, %p100
      %p102 = scmp.ne.s32.totalorder %s94, %s97
      %p103 = scmp.eq.s32.totalorder %s16, 0
      %p104 = por %p102, %p103
      %p105 = scmp.ne.s32.totalorder %s94, %s97
      %p106 = scmp.eq.s32.totalorder %s21, 1
      %p107 = por %p105, %p106
      %p108 = scmp.ne.s32.totalorder %s97, %s98
      %p109 = scmp.eq.s32.totalorder %s21, 0
      %p110 = por %p108, %p109
      %p111 = scmp.ne.s32.totalorder %s97, %s98
      %p112 = scmp.eq.s32.totalorder %s22, 1
      %p113 = por %p111, %p112
      %p115 = scmp.ne.s32.totalorder %s98, %s114
      %p116 = scmp.eq.s32.totalorder %s22, 0
      %p117 = por %p115, %p116
      %p118 = scmp.le.s32.totalorder 1, %s16
      %p119 = scmp.lt.s32.totalorder %s16, 3
      %p120 = pnand %p118, %p119
      %p121 = pneg %p120
      // Predicated region
      $region9: #{tpu_custom_call.1} parent=5 // pred_check
        _
      $region10: #{tpu_custom_call.1} parent=5 // pred_check_branch
        %123 = sbr.rel (%p120) target = $region12
      $region11: #{tpu_custom_call.1} parent=5 // pred_region
        %s124 = ssub.s32 %s16, 1
        // Predicated region
        $region13: #{tpu_custom_call.1} parent=11 // pred_check
          %p125 = pneg %p63
        $region14: #{tpu_custom_call.1} parent=11 // pred_check_branch
          %127 = sbr.rel (%p125) target = $region16
        $region15: #{tpu_custom_call.1} parent=11 // pred_region
          %129 = vsyncadd [#allocation7], 0
          %s130 = sshll.u32 %s1, 4
          %s131 = int_to_ptr.hbm [resolvable:$true] %s130
          %s132 = sshll.u32 [#allocation6], 4
          %s133 = int_to_ptr.vmem [resolvable:$true] %s132
          %138 = dma.hbm_to_vmem [thread:$0]  %s131, 512, %s133, [#allocation7], 256, 256, 16
        $region16: #{tpu_custom_call.1} parent=11 // pred_fallthru
          _
        // Predicated region
        $region17: #{tpu_custom_call.1} parent=11 // pred_check
          %p139 = pneg %p84
        $region18: #{tpu_custom_call.1} parent=11 // pred_check_branch
          %141 = sbr.rel (%p139) target = $region20
        $region19: #{tpu_custom_call.1} parent=11 // pred_region
          %143 = vsyncadd [#allocation7], 0
          %s145 = sshll.u32 %s2, 4
          %s146 = int_to_ptr.hbm [resolvable:$true] %s145
          %s147 = sshll.u32 [#allocation8], 4
          %s148 = int_to_ptr.vmem [resolvable:$true] %s147
          %150 = dma.hbm_to_vmem [thread:$0]  %s146, 128, %s148, [#allocation7]
        $region20: #{tpu_custom_call.1} parent=11 // pred_fallthru
          _
      $region12: #{tpu_custom_call.1} parent=5 // pred_fallthru
        _
      %p151 = scmp.lt.s32.totalorder %s16, 2
      // Predicated region
      $region21: #{tpu_custom_call.1} parent=5 // pred_check
        %p152 = pneg %p151
      $region22: #{tpu_custom_call.1} parent=5 // pred_check_branch
        %154 = sbr.rel (%p152) target = $region24
      $region23: #{tpu_custom_call.1} parent=5 // pred_region
        // Predicated region
        $region25: #{tpu_custom_call.1} parent=23 // pred_check
          %p155 = pneg %p36
        $region26: #{tpu_custom_call.1} parent=23 // pred_check_branch
          %157 = sbr.rel (%p155) target = $region28
        $region27: #{tpu_custom_call.1} parent=23 // pred_region
          %s158 = sand.u32 %s26, 1
          %s159 = scalar_lea.sflag [#allocation4], %s158
          %s160 = sand.u32 %s26, 1
          %s161 = smul.addr %s160, 32
          %s162 = scalar_lea.vmem [#allocation3], %s161
          %s163 = smul.u32 2, %s16
          %165 = vsyncadd %s159, 0
          %s166 = smul.addr %s163, 2
          %s167 = smul.addr %s166, 8
          %s168 = scalar_lea.hbm %s0, %s167
          %s169 = sshll.u32 %s168, 4
          %s170 = int_to_ptr.hbm [resolvable:$true] %s169
          %s171 = sshll.u32 %s162, 4
          %s172 = int_to_ptr.vmem [resolvable:$true] %s171
          %177 = dma.hbm_to_vmem [thread:$0]  %s170, 512, %s172, %s159, 256, 256, 16
        $region28: #{tpu_custom_call.1} parent=23 // pred_fallthru
          _
      $region24: #{tpu_custom_call.1} parent=5 // pred_fallthru
        _
      %p178 = scmp.le.s32.totalorder 1, %s16
      %p179 = scmp.lt.s32.totalorder %s16, 3
      %p180 = pnand %p178, %p179
      %p181 = pneg %p180
      // Predicated region
      $region29: #{tpu_custom_call.1} parent=5 // pred_check
        _
      $region30: #{tpu_custom_call.1} parent=5 // pred_check_branch
        %183 = sbr.rel (%p180) target = $region32
      $region31: #{tpu_custom_call.1} parent=5 // pred_region
        %s184 = ssub.s32 %s16, 1
        %s185 = sand.u32 %s29, 1
        %s186 = scalar_lea.sflag [#allocation4], %s185
        %s187 = sand.u32 %s29, 1
        %s188 = smul.addr %s187, 32
        %s189 = scalar_lea.vmem [#allocation3], %s188
        // Predicated region
        $region33: #{tpu_custom_call.1} parent=31 // pred_check
          %p190 = pneg %p42
        $region34: #{tpu_custom_call.1} parent=31 // pred_check_branch
          %192 = sbr.rel (%p190) target = $region36
        $region35: #{tpu_custom_call.1} parent=31 // pred_region
          %194 = dma.done %s186, 512
        $region36: #{tpu_custom_call.1} parent=31 // pred_fallthru
          _
        // Predicated region
        $region37: #{tpu_custom_call.1} parent=31 // pred_check
          %p195 = pneg %p63
        $region38: #{tpu_custom_call.1} parent=31 // pred_check_branch
          %197 = sbr.rel (%p195) target = $region40
        $region39: #{tpu_custom_call.1} parent=31 // pred_region
          %199 = dma.done [#allocation7], 512
        $region40: #{tpu_custom_call.1} parent=31 // pred_fallthru
          _
        // Predicated region
        $region41: #{tpu_custom_call.1} parent=31 // pred_check
          %p200 = pneg %p84
        $region42: #{tpu_custom_call.1} parent=31 // pred_check_branch
          %202 = sbr.rel (%p200) target = $region44
        $region43: #{tpu_custom_call.1} parent=31 // pred_region
          %204 = dma.done [#allocation7], 128
        $region44: #{tpu_custom_call.1} parent=31 // pred_fallthru
          _
        %s205 = sand.u32 %s29, 1
        %s206 = scalar_lea.sflag [#allocation4], %s205
        %s207 = sand.u32 %s29, 1
        %s208 = smul.addr %s207, 32
        %s209 = scalar_lea.vmem [#allocation3], %s208
        %p210 = pneg %p42
        %p211 = pneg %p39
        %p212 = pneg %p63
        %p213 = pneg %p60
        %p214 = pneg %p84
        %p215 = pneg %p81
        %p216 = pneg %p110
        %p217 = pneg %p107
        %s218 = sand.u32 %s97, 1
        %s219 = scalar_lea.sflag [#allocation5], %s218
        %s220 = sand.u32 %s97, 1
        %s221 = smul.addr %s220, 32
        %s222 = scalar_lea.vmem [#allocation9], %s221
        %s223 = smul.u32 2, %s21
        %s224 = smul.u32 2, %s21
        %v225 = vld [vmem:[#allocation8] sm:$0xff]
        %v226 = vld [vmem:[%s189] sm:$0xff]
        %v227 = vld [vmem:[%s189 + $0x8] sm:$0xff]
        %228 = vrot.lane.b32.xlu0 %v226, 17
        %v229 = vpop.permute.xlu0 %228
        %230 = vrot.lane.b32.xlu0 %v227, 17
        %v231 = vpop.permute.xlu0 %230
        %v232 = vlaneseq
        %v233 = vand.u32 %v232, 127
        %vm234 = vcmp.lt.s32.totalorder %v233, 17
        %v235 = vsel %vm234, %v229, %v231
        %v236 = vsel %vm234, %v231, %v229
        %v237 = vld [vmem:[#allocation6] ss:$8 sm:$0x3]
        %v239 = vperm.slane %v237, 0
        %v240 = vperm.slane %v237, 1
        %v243 = vmul.f32 %v236, %v239
        %v244 = vmul.f32 %v235, %v240
        %245 = vst [vmem:[#allocation2] sm:$0xff] %v243
        %246 = vst [vmem:[#allocation2 + $0x8] sm:$0xff] %v244
        %247 = vrot.lane.b32.xlu0 %v226, 16
        %v248 = vpop.permute.xlu0 %247
        %249 = vrot.lane.b32.xlu0 %v227, 16
        %v250 = vpop.permute.xlu0 %249
        %vm251 = vcmp.lt.s32.totalorder %v233, 16
        %v252 = vsel %vm251, %v248, %v250
        %v253 = vsel %vm251, %v250, %v248
        %s254 = scalar_lea.vmem [#allocation6], 1
        %v255 = vld [vmem:[%s254] ss:$8 sm:$0x3]
        %v257 = vperm.slane %v255, 0
        %v258 = vperm.slane %v255, 1
        %v261 = vmul.f32 %v253, %v257
        %v262 = vmul.f32 %v252, %v258
        %263 = vst [vmem:[#allocation2 + $0x10] sm:$0xff] %v261
        %264 = vst [vmem:[#allocation2 + $0x18] sm:$0xff] %v262
        %265 = vrot.lane.b32.xlu0 %v226, 15
        %v266 = vpop.permute.xlu0 %265
        %267 = vrot.lane.b32.xlu0 %v227, 15
        %v268 = vpop.permute.xlu0 %267
        %vm269 = vcmp.lt.s32.totalorder %v233, 15
        %v270 = vsel %vm269, %v266, %v268
        %v271 = vsel %vm269, %v268, %v266
        %s272 = scalar_lea.vmem [#allocation6], 2
        %v273 = vld [vmem:[%s272] ss:$8 sm:$0x3]
        %v275 = vperm.slane %v273, 0
        %v276 = vperm.slane %v273, 1
        %v279 = vmul.f32 %v271, %v275
        %v280 = vmul.f32 %v270, %v276
        %281 = vst [vmem:[#allocation2 + $0x20] sm:$0xff] %v279
        %282 = vst [vmem:[#allocation2 + $0x28] sm:$0xff] %v280
        %283 = vrot.lane.b32.xlu0 %v226, 1
        %v284 = vpop.permute.xlu0 %283
        %285 = vrot.lane.b32.xlu0 %v227, 1
        %v286 = vpop.permute.xlu0 %285
        %vm287 = vcmp.lt.s32.totalorder %v233, 1
        %v288 = vsel %vm287, %v284, %v286
        %v289 = vsel %vm287, %v286, %v284
        %s290 = scalar_lea.vmem [#allocation6], 3
        %v291 = vld [vmem:[%s290] ss:$8 sm:$0x3]
        %v293 = vperm.slane %v291, 0
        %v294 = vperm.slane %v291, 1
        %v297 = vmul.f32 %v289, %v293
        %v298 = vmul.f32 %v288, %v294
        %299 = vst [vmem:[#allocation2 + $0x30] sm:$0xff] %v297
        %300 = vst [vmem:[#allocation2 + $0x38] sm:$0xff] %v298
        %301 = vst [vmem:[#allocation2 + $0x40] sm:$0xff] %v226
        %302 = vst [vmem:[#allocation2 + $0x48] sm:$0xff] %v227
        %303 = vrot.lane.b32.xlu0 %v226, 127
        %v304 = vpop.permute.xlu0 %303
        %305 = vrot.lane.b32.xlu0 %v227, 127
        %v306 = vpop.permute.xlu0 %305
        %vm307 = vcmp.lt.s32.totalorder %v233, 127
        %v308 = vsel %vm307, %v304, %v306
        %v309 = vsel %vm307, %v306, %v304
        %s310 = scalar_lea.vmem [#allocation6], 5
        %v311 = vld [vmem:[%s310] ss:$8 sm:$0x3]
        %v313 = vperm.slane %v311, 0
        %v314 = vperm.slane %v311, 1
        %v317 = vmul.f32 %v308, %v313
        %v318 = vmul.f32 %v309, %v314
        %319 = vst [vmem:[#allocation2 + $0x50] sm:$0xff] %v317
        %320 = vst [vmem:[#allocation2 + $0x58] sm:$0xff] %v318
        %321 = vrot.lane.b32.xlu0 %v226, 113
        %v322 = vpop.permute.xlu0 %321
        %323 = vrot.lane.b32.xlu0 %v227, 113
        %v324 = vpop.permute.xlu0 %323
        %vm325 = vcmp.lt.s32.totalorder %v233, 113
        %v326 = vsel %vm325, %v322, %v324
        %v327 = vsel %vm325, %v324, %v322
        %s328 = scalar_lea.vmem [#allocation6], 6
        %v329 = vld [vmem:[%s328] ss:$8 sm:$0x3]
        %v331 = vperm.slane %v329, 0
        %v332 = vperm.slane %v329, 1
        %v335 = vmul.f32 %v326, %v331
        %v336 = vmul.f32 %v327, %v332
        %337 = vst [vmem:[#allocation2 + $0x60] sm:$0xff] %v335
        %338 = vst [vmem:[#allocation2 + $0x68] sm:$0xff] %v336
        %339 = vrot.lane.b32.xlu0 %v226, 112
        %v340 = vpop.permute.xlu0 %339
        %341 = vrot.lane.b32.xlu0 %v227, 112
        %v342 = vpop.permute.xlu0 %341
        %vm343 = vcmp.lt.s32.totalorder %v233, 112
        %v344 = vsel %vm343, %v340, %v342
        %v345 = vsel %vm343, %v342, %v340
        %s346 = scalar_lea.vmem [#allocation6], 7
        %v347 = vld [vmem:[%s346] ss:$8 sm:$0x3]
        %v349 = vperm.slane %v347, 0
        %v350 = vperm.slane %v347, 1
        %v353 = vmul.f32 %v344, %v349
        %v354 = vmul.f32 %v345, %v350
        %355 = vst [vmem:[#allocation2 + $0x70] sm:$0xff] %v353
        %356 = vst [vmem:[#allocation2 + $0x78] sm:$0xff] %v354
        %357 = vrot.lane.b32.xlu0 %v226, 111
        %v358 = vpop.permute.xlu0 %357
        %359 = vrot.lane.b32.xlu0 %v227, 111
        %v360 = vpop.permute.xlu0 %359
        %vm361 = vcmp.lt.s32.totalorder %v233, 111
        %v362 = vsel %vm361, %v358, %v360
        %v363 = vsel %vm361, %v360, %v358
        %s364 = scalar_lea.vmem [#allocation6], 16
        %v365 = vld [vmem:[%s364] ss:$8 sm:$0x3]
        %v367 = vperm.slane %v365, 0
        %v368 = vperm.slane %v365, 1
        %v371 = vmul.f32 %v362, %v367
        %v372 = vmul.f32 %v363, %v368
        %373 = vst [vmem:[#allocation2 + $0x80] sm:$0xff] %v371
        %374 = vst [vmem:[#allocation2 + $0x88] sm:$0xff] %v372
        %v375 = vld [vmem:[#allocation2] sm:$0xff]
        %v376 = vld [vmem:[#allocation2 + $0x8] sm:$0xff]
        %v377 = vld [vmem:[#allocation2 + $0x10] sm:$0xff]
        %v378 = vld [vmem:[#allocation2 + $0x18] sm:$0xff]
        %v379 = vld [vmem:[#allocation2 + $0x20] sm:$0xff]
        %v380 = vld [vmem:[#allocation2 + $0x28] sm:$0xff]
        %v381 = vld [vmem:[#allocation2 + $0x30] sm:$0xff]
        %v382 = vld [vmem:[#allocation2 + $0x38] sm:$0xff]
        %v383 = vld [vmem:[#allocation2 + $0x40] sm:$0xff]
        %v384 = vld [vmem:[#allocation2 + $0x48] sm:$0xff]
        %v385 = vld [vmem:[#allocation2 + $0x50] sm:$0xff]
        %v386 = vld [vmem:[#allocation2 + $0x58] sm:$0xff]
        %v387 = vld [vmem:[#allocation2 + $0x60] sm:$0xff]
        %v388 = vld [vmem:[#allocation2 + $0x68] sm:$0xff]
        %v389 = vld [vmem:[#allocation2 + $0x70] sm:$0xff]
        %v390 = vld [vmem:[#allocation2 + $0x78] sm:$0xff]
        %v391 = vld [vmem:[#allocation2 + $0x80] sm:$0xff]
        %v392 = vld [vmem:[#allocation2 + $0x88] sm:$0xff]
        %vm393 = vcmask 588800
        %v395 = vsel %vm393, %v225, 0
        %397 = vmatpush.msra.mxu0 0.0
        %398 = vmatpush.msra.mxu0 0.0
        %399 = vmatpush.msra.mxu0 0.0
        %400 = vmatpush.msra.mxu0 0.0
        %401 = vmatpush.msra.mxu0 0.0
        %402 = vmatpush.msra.mxu0 0.0
        %403 = vmatpush.msra.mxu0 0.0
        %404 = vmatpush.msra.mxu0 %v391
        %405 = vmatpush.msra.mxu0 %v389
        %406 = vmatpush.msra.mxu0 %v387
        %407 = vmatpush.msra.mxu0 %v385
        %408 = vmatpush.msra.mxu0 %v383
        %409 = vmatpush.msra.mxu0 %v381
        %410 = vmatpush.msra.mxu0 %v379
        %411 = vmatpush.msra.mxu0 %v377
        %412 = vmatpush.msra.mxu0 %v375
        %413 = vmatmul.f32.gmra.mxu0 %v395
        %v414 = vpop.f32.mrf.mxu0
        %v415 = vadd.f32 0.0, %v414
        %416 = vdwg.mxu0
        %417 = vmatpush.msra.mxu0 0.0
        %418 = vmatpush.msra.mxu0 0.0
        %419 = vmatpush.msra.mxu0 0.0
        %420 = vmatpush.msra.mxu0 0.0
        %421 = vmatpush.msra.mxu0 0.0
        %422 = vmatpush.msra.mxu0 0.0
        %423 = vmatpush.msra.mxu0 0.0
        %424 = vmatpush.msra.mxu0 %v392
        %425 = vmatpush.msra.mxu0 %v390
        %426 = vmatpush.msra.mxu0 %v388
        %427 = vmatpush.msra.mxu0 %v386
        %428 = vmatpush.msra.mxu0 %v384
        %429 = vmatpush.msra.mxu0 %v382
        %430 = vmatpush.msra.mxu0 %v380
        %431 = vmatpush.msra.mxu0 %v378
        %432 = vmatpush.msra.mxu0 %v376
        %433 = vmatmul.f32.gmra.mxu0 %v395
        %v434 = vpop.f32.mrf.mxu0
        %v435 = vadd.f32 0.0, %v434
        %436 = vdwg.mxu0
        %v437 = vmax.f32 %v415, 0.0
        %v438 = vmax.f32 %v435, 0.0
        %439 = vst [vmem:[%s222] sm:$0xff] %v437
        %440 = vst [vmem:[%s222 + $0x8] sm:$0xff] %v438
        %s441 = scalar_lea.vmem %s189, 16 [#allocation3]
        %v442 = vld [vmem:[%s441] sm:$0xff]
        %v443 = vld [vmem:[%s441 + $0x8] sm:$0xff]
        %444 = vrot.lane.b32.xlu0 %v442, 17
        %v445 = vpop.permute.xlu0 %444
        %446 = vrot.lane.b32.xlu0 %v443, 17
        %v447 = vpop.permute.xlu0 %446
        %v448 = vsel %vm234, %v445, %v447
        %v449 = vsel %vm234, %v447, %v445
        %v450 = vld [vmem:[#allocation6] ss:$8 sm:$0x3]
        %v452 = vperm.slane %v450, 0
        %v453 = vperm.slane %v450, 1
        %v456 = vmul.f32 %v449, %v452
        %v457 = vmul.f32 %v448, %v453
        %458 = vst [vmem:[#allocation2] sm:$0xff] %v456
        %459 = vst [vmem:[#allocation2 + $0x8] sm:$0xff] %v457
        %460 = vrot.lane.b32.xlu0 %v442, 16
        %v461 = vpop.permute.xlu0 %460
        %462 = vrot.lane.b32.xlu0 %v443, 16
        %v463 = vpop.permute.xlu0 %462
        %v464 = vsel %vm251, %v461, %v463
        %v465 = vsel %vm251, %v463, %v461
        %v466 = vld [vmem:[%s254] ss:$8 sm:$0x3]
        %v468 = vperm.slane %v466, 0
        %v469 = vperm.slane %v466, 1
        %v472 = vmul.f32 %v465, %v468
        %v473 = vmul.f32 %v464, %v469
        %474 = vst [vmem:[#allocation2 + $0x10] sm:$0xff] %v472
        %475 = vst [vmem:[#allocation2 + $0x18] sm:$0xff] %v473
        %476 = vrot.lane.b32.xlu0 %v442, 15
        %v477 = vpop.permute.xlu0 %476
        %478 = vrot.lane.b32.xlu0 %v443, 15
        %v479 = vpop.permute.xlu0 %478
        %v480 = vsel %vm269, %v477, %v479
        %v481 = vsel %vm269, %v479, %v477
        %v482 = vld [vmem:[%s272] ss:$8 sm:$0x3]
        %v484 = vperm.slane %v482, 0
        %v485 = vperm.slane %v482, 1
        %v488 = vmul.f32 %v481, %v484
        %v489 = vmul.f32 %v480, %v485
        %490 = vst [vmem:[#allocation2 + $0x20] sm:$0xff] %v488
        %491 = vst [vmem:[#allocation2 + $0x28] sm:$0xff] %v489
        %492 = vrot.lane.b32.xlu0 %v442, 1
        %v493 = vpop.permute.xlu0 %492
        %494 = vrot.lane.b32.xlu0 %v443, 1
        %v495 = vpop.permute.xlu0 %494
        %v496 = vsel %vm287, %v493, %v495
        %v497 = vsel %vm287, %v495, %v493
        %v498 = vld [vmem:[%s290] ss:$8 sm:$0x3]
        %v500 = vperm.slane %v498, 0
        %v501 = vperm.slane %v498, 1
        %v504 = vmul.f32 %v497, %v500
        %v505 = vmul.f32 %v496, %v501
        %506 = vst [vmem:[#allocation2 + $0x30] sm:$0xff] %v504
        %507 = vst [vmem:[#allocation2 + $0x38] sm:$0xff] %v505
        %508 = vst [vmem:[#allocation2 + $0x40] sm:$0xff] %v442
        %509 = vst [vmem:[#allocation2 + $0x48] sm:$0xff] %v443
        %510 = vrot.lane.b32.xlu0 %v442, 127
        %v511 = vpop.permute.xlu0 %510
        %512 = vrot.lane.b32.xlu0 %v443, 127
        %v513 = vpop.permute.xlu0 %512
        %v514 = vsel %vm307, %v511, %v513
        %v515 = vsel %vm307, %v513, %v511
        %v516 = vld [vmem:[%s310] ss:$8 sm:$0x3]
        %v518 = vperm.slane %v516, 0
        %v519 = vperm.slane %v516, 1
        %v522 = vmul.f32 %v514, %v518
        %v523 = vmul.f32 %v515, %v519
        %524 = vst [vmem:[#allocation2 + $0x50] sm:$0xff] %v522
        %525 = vst [vmem:[#allocation2 + $0x58] sm:$0xff] %v523
        %526 = vrot.lane.b32.xlu0 %v442, 113
        %v527 = vpop.permute.xlu0 %526
        %528 = vrot.lane.b32.xlu0 %v443, 113
        %v529 = vpop.permute.xlu0 %528
        %v530 = vsel %vm325, %v527, %v529
        %v531 = vsel %vm325, %v529, %v527
        %v532 = vld [vmem:[%s328] ss:$8 sm:$0x3]
        %v534 = vperm.slane %v532, 0
        %v535 = vperm.slane %v532, 1
        %v538 = vmul.f32 %v530, %v534
        %v539 = vmul.f32 %v531, %v535
        %540 = vst [vmem:[#allocation2 + $0x60] sm:$0xff] %v538
        %541 = vst [vmem:[#allocation2 + $0x68] sm:$0xff] %v539
        %542 = vrot.lane.b32.xlu0 %v442, 112
        %v543 = vpop.permute.xlu0 %542
        %544 = vrot.lane.b32.xlu0 %v443, 112
        %v545 = vpop.permute.xlu0 %544
        %v546 = vsel %vm343, %v543, %v545
        %v547 = vsel %vm343, %v545, %v543
        %v548 = vld [vmem:[%s346] ss:$8 sm:$0x3]
        %v550 = vperm.slane %v548, 0
        %v551 = vperm.slane %v548, 1
        %v554 = vmul.f32 %v546, %v550
        %v555 = vmul.f32 %v547, %v551
        %556 = vst [vmem:[#allocation2 + $0x70] sm:$0xff] %v554
        %557 = vst [vmem:[#allocation2 + $0x78] sm:$0xff] %v555
        %558 = vrot.lane.b32.xlu0 %v442, 111
        %v559 = vpop.permute.xlu0 %558
        %560 = vrot.lane.b32.xlu0 %v443, 111
        %v561 = vpop.permute.xlu0 %560
        %v562 = vsel %vm361, %v559, %v561
        %v563 = vsel %vm361, %v561, %v559
        %v564 = vld [vmem:[%s364] ss:$8 sm:$0x3]
        %v566 = vperm.slane %v564, 0
        %v567 = vperm.slane %v564, 1
        %v570 = vmul.f32 %v562, %v566
        %v571 = vmul.f32 %v563, %v567
        %572 = vst [vmem:[#allocation2 + $0x80] sm:$0xff] %v570
        %573 = vst [vmem:[#allocation2 + $0x88] sm:$0xff] %v571
        %v574 = vld [vmem:[#allocation2] sm:$0xff]
        %v575 = vld [vmem:[#allocation2 + $0x8] sm:$0xff]
        %v576 = vld [vmem:[#allocation2 + $0x10] sm:$0xff]
        %v577 = vld [vmem:[#allocation2 + $0x18] sm:$0xff]
        %v578 = vld [vmem:[#allocation2 + $0x20] sm:$0xff]
        %v579 = vld [vmem:[#allocation2 + $0x28] sm:$0xff]
        %v580 = vld [vmem:[#allocation2 + $0x30] sm:$0xff]
        %v581 = vld [vmem:[#allocation2 + $0x38] sm:$0xff]
        %v582 = vld [vmem:[#allocation2 + $0x40] sm:$0xff]
        %v583 = vld [vmem:[#allocation2 + $0x48] sm:$0xff]
        %v584 = vld [vmem:[#allocation2 + $0x50] sm:$0xff]
        %v585 = vld [vmem:[#allocation2 + $0x58] sm:$0xff]
        %v586 = vld [vmem:[#allocation2 + $0x60] sm:$0xff]
        %v587 = vld [vmem:[#allocation2 + $0x68] sm:$0xff]
        %v588 = vld [vmem:[#allocation2 + $0x70] sm:$0xff]
        %v589 = vld [vmem:[#allocation2 + $0x78] sm:$0xff]
        %v590 = vld [vmem:[#allocation2 + $0x80] sm:$0xff]
        %v591 = vld [vmem:[#allocation2 + $0x88] sm:$0xff]
        %592 = vmatpush.msra.mxu0 0.0
        %593 = vmatpush.msra.mxu0 0.0
        %594 = vmatpush.msra.mxu0 0.0
        %595 = vmatpush.msra.mxu0 0.0
        %596 = vmatpush.msra.mxu0 0.0
        %597 = vmatpush.msra.mxu0 0.0
        %598 = vmatpush.msra.mxu0 0.0
        %599 = vmatpush.msra.mxu0 %v590
        %600 = vmatpush.msra.mxu0 %v588
        %601 = vmatpush.msra.mxu0 %v586
        %602 = vmatpush.msra.mxu0 %v584
        %603 = vmatpush.msra.mxu0 %v582
        %604 = vmatpush.msra.mxu0 %v580
        %605 = vmatpush.msra.mxu0 %v578
        %606 = vmatpush.msra.mxu0 %v576
        %607 = vmatpush.msra.mxu0 %v574
        %608 = vmatmul.f32.gmra.mxu0 %v395
        %v609 = vpop.f32.mrf.mxu0
        %v610 = vadd.f32 0.0, %v609
        %611 = vdwg.mxu0
        %612 = vmatpush.msra.mxu0 0.0
        %613 = vmatpush.msra.mxu0 0.0
        %614 = vmatpush.msra.mxu0 0.0
        %615 = vmatpush.msra.mxu0 0.0
        %616 = vmatpush.msra.mxu0 0.0
        %617 = vmatpush.msra.mxu0 0.0
        %618 = vmatpush.msra.mxu0 0.0
        %619 = vmatpush.msra.mxu0 %v591
        %620 = vmatpush.msra.mxu0 %v589
        %621 = vmatpush.msra.mxu0 %v587
        %622 = vmatpush.msra.mxu0 %v585
        %623 = vmatpush.msra.mxu0 %v583
        %624 = vmatpush.msra.mxu0 %v581
        %625 = vmatpush.msra.mxu0 %v579
        %626 = vmatpush.msra.mxu0 %v577
        %627 = vmatpush.msra.mxu0 %v575
        %628 = vmatmul.f32.gmra.mxu0 %v395
        %v629 = vpop.f32.mrf.mxu0
        %v630 = vadd.f32 0.0, %v629
        %631 = vdwg.mxu0
        %v632 = vmax.f32 %v610, 0.0
        %v633 = vmax.f32 %v630, 0.0
        %s634 = scalar_lea.vmem %s222, 16 [#allocation9]
        %635 = vst [vmem:[%s634] sm:$0xff] %v632
        %636 = vst [vmem:[%s634 + $0x8] sm:$0xff] %v633
        %s637 = sand.u32 %s97, 1
        %s638 = scalar_lea.sflag [#allocation5], %s637
        %s639 = sand.u32 %s97, 1
        %s640 = smul.addr %s639, 32
        %s641 = scalar_lea.vmem [#allocation9], %s640
        // Predicated region
        $region45: #{tpu_custom_call.1} parent=31 // pred_check
          %p642 = pneg %p107
        $region46: #{tpu_custom_call.1} parent=31 // pred_check_branch
          %644 = sbr.rel (%p642) target = $region48
        $region47: #{tpu_custom_call.1} parent=31 // pred_region
          %s645 = smul.u32 2, %s21
          %647 = vsyncadd %s638, 0
          %s648 = smul.addr %s645, 2
          %s649 = smul.addr %s648, 8
          %s650 = scalar_lea.hbm %s3, %s649
          %s651 = sshll.u32 %s641, 4
          %s652 = int_to_ptr.vmem [resolvable:$true] %s651
          %s653 = sshll.u32 %s650, 4
          %s654 = int_to_ptr.hbm [resolvable:$true] %s653
          %659 = dma.vmem_to_hbm [thread:$0]  %s652, 512, %s654, %s638, 256, 256, 16
        $region48: #{tpu_custom_call.1} parent=31 // pred_fallthru
          _
      $region32: #{tpu_custom_call.1} parent=5 // pred_fallthru
        _
      %p660 = scmp.le.s32.totalorder 2, %s16
      // Predicated region
      $region49: #{tpu_custom_call.1} parent=5 // pred_check
        %p661 = pneg %p660
      $region50: #{tpu_custom_call.1} parent=5 // pred_check_branch
        %663 = sbr.rel (%p661) target = $region52
      $region51: #{tpu_custom_call.1} parent=5 // pred_region
        %s664 = ssub.s32 %s16, 2
        // Predicated region
        $region53: #{tpu_custom_call.1} parent=51 // pred_check
          %p665 = pneg %p113
        $region54: #{tpu_custom_call.1} parent=51 // pred_check_branch
          %667 = sbr.rel (%p665) target = $region56
        $region55: #{tpu_custom_call.1} parent=51 // pred_region
          %s668 = sand.u32 %s98, 1
          %s669 = scalar_lea.sflag [#allocation5], %s668
          %s670 = sand.u32 %s98, 1
          %s671 = smul.addr %s670, 32
          %s672 = scalar_lea.vmem [#allocation9], %s671
          %674 = dma.done %s669, 512
        $region56: #{tpu_custom_call.1} parent=51 // pred_fallthru
          _
      $region52: #{tpu_custom_call.1} parent=5 // pred_fallthru
        _
    $region6: #{tpu_custom_call.1} parent=1 // loop_footer
      %s20 = sadd.s32 1, %s16
    $region7: #{tpu_custom_call.1} parent=1 // loop_footer_branch
      %15 = sbr.rel target = $region3
    $region8: #{tpu_custom_call.1} parent=1 // loop_exit
      _
    %675 = vsyncpa [#allocation4], 1
    %s676 = scalar_lea.sflag [#allocation4], 1
    %677 = vsyncpa %s676, 1
    %678 = vsyncpa [#allocation7], 1
    %679 = vsyncpa [#allocation5], 1
    %s680 = scalar_lea.sflag [#allocation5], 1
    %681 = vsyncpa %s680, 1

</llo_original>
